<compile_context>
chip_gen: v7x
topology: tpu7x:2x2x1
jax: 0.10.0
libtpu: 0.0.40
codegen_flags: <defaults>
</compile_context>

<pallas_src>
import numpy as np
import jax
import jax.numpy as jnp
from jax import lax
from jax.experimental import pallas as pl
from jax.experimental.pallas import tpu as pltpu


# ----------------------------------------------------------------------------
# Kernel factory
# ----------------------------------------------------------------------------
def _make_con_mod_kernel(slab, n_full, rem, compute_dtype):
    """slab/n_full/rem are trace-time ints describing the in-tile row slabbing."""

    def kernel(x_ref, expand_ref, w_ref, b_ref, o_ref):
        # x_ref:      (TB, tc)        batch tile of the raw continuous features
        # expand_ref: (tc, tc*E)      block-diagonal ones (resident, constant idx)
        # w_ref/b_ref:(1, tc*E)       flattened weight / bias slice for this C tile
        # o_ref:      (TB, tc*E)      lane-dense output tile
        w = w_ref[...].astype(compute_dtype)      # hoisted once per grid step
        b = b_ref[...].astype(compute_dtype)
        ex = expand_ref[...]                      # f32 0/1 matrix

        def do_slab(start, rows):
            x = x_ref[pl.ds(start, rows), :].astype(jnp.float32)
            # Exact lane expansion on the MXU: xe[r, c*E + e] = x[r, c]
            # (precision=HIGHEST keeps the f32 operands un-truncated).
            xe = jnp.dot(
                x, ex,
                precision=lax.Precision.HIGHEST,
                preferred_element_type=jnp.float32,
            )
            emb = xe.astype(compute_dtype) * w + b
            o_ref[pl.ds(start, rows), :] = jnp.maximum(emb, 0.0).astype(o_ref.dtype)

        if n_full == 1 and rem == 0:
            # Single slab covers the whole tile.
            do_slab(0, slab)
        else:
            def body(s, carry):
                start = pl.multiple_of(s * slab, slab)
                do_slab(start, slab)
                return carry

            lax.fori_loop(0, n_full, body, 0, unroll=2)
            if rem:
                do_slab(n_full * slab, rem)

    return kernel


# ----------------------------------------------------------------------------
# Wrapper
# ----------------------------------------------------------------------------
def con_mod_forward(con_batch, con_w, con_b, *, block_b=None):
    B, C = con_batch.shape
    C2, E = con_w.shape
    assert C == C2 and con_b.shape == (C, E)

    out_dtype = jnp.result_type(con_batch.dtype, con_w.dtype, con_b.dtype)
    itemsize = jnp.dtype(out_dtype).itemsize
    # bf16 elementwise on bf16-native VALUs when the result is bf16; f32 otherwise.
    compute_dtype = jnp.bfloat16 if out_dtype == jnp.bfloat16 else jnp.float32

    # ---- column tiling: keep the constant expansion matrix bounded -------------
    expand_budget = 4 * 1024 * 1024
    if C <= 128 or C * C * E * 4 <= expand_budget:
        tc = C
    else:
        tc = 128                                   # tc must be a multiple of 128
        while (2 * tc) <= C and (2 * tc) * (2 * tc) * E * 4 <= expand_budget:
            tc *= 2
    tcE = tc * E
    nc = pl.cdiv(C, tc)
    expand_bytes = tc * tcE * 4

    # ---- in-tile row slabs: per-slab f32 intermediate stays <= ~512 KiB --------
    slab = max(128, min(512, (512 * 1024) // max(1, tcE * 4)))
    slab = max(8, (slab // 8) * 8)

    # ---- batch tiling: ~8 MiB of output per tile, VMEM-budget aware ------------
    per_row_out = tcE * itemsize
    out_tile_bytes = min(8 * 1024 * 1024,
                         max(1 * 1024 * 1024,
                             (40 * 1024 * 1024 - 2 * expand_bytes) // 2))
    if block_b is not None:
        tb = min(block_b, B)
        if tb < B:
            tb = max(8, (tb // 8) * 8)
    else:
        tb = out_tile_bytes // max(1, per_row_out)
        # Keep >= ~4 batch tiles when B is large enough (v7x megacore sharding).
        quarter = -(-B // 4)
        quarter = -(-quarter // slab) * slab
        if quarter * per_row_out >= (1 << 20):
            tb = min(tb, quarter)
        tb = max(slab, (tb // slab) * slab)
    if tb >= B:
        tb = B                                     # full-dim block is always legal
    slab = min(slab, tb)
    n_full = tb // slab
    rem = tb - n_full * slab
    nb = pl.cdiv(B, tb)

    # ---- constant block-diagonal ones: expand[c, c*E + e] = 1 ------------------
    expand = jnp.asarray(np.repeat(np.eye(tc, dtype=np.float32), E, axis=1))
    w_flat = con_w.reshape(1, C * E)
    b_flat = con_b.reshape(1, C * E)

    kernel = _make_con_mod_kernel(slab, n_full, rem, compute_dtype)

    out_flat = pl.pallas_call(
        kernel,
        out_shape=jax.ShapeDtypeStruct((B, C * E), out_dtype),
        grid=(nb, nc),
        in_specs=[
            pl.BlockSpec((tb, tc), lambda i, j: (i, j)),     # batch x col tile of x
            pl.BlockSpec((tc, tcE), lambda i, j: (0, 0)),    # expansion, resident
            pl.BlockSpec((1, tcE), lambda i, j: (0, j)),     # weights for this C tile
            pl.BlockSpec((1, tcE), lambda i, j: (0, j)),     # bias for this C tile
        ],
        out_specs=pl.BlockSpec((tb, tcE), lambda i, j: (i, j)),
        compiler_params=pltpu.CompilerParams(
            dimension_semantics=("parallel", "parallel"),
            vmem_limit_bytes=48 * 1024 * 1024,
        ),
    )(con_batch, expand, w_flat, b_flat)
    return out_flat.reshape(B, C, E)


# ----------------------------------------------------------------------------
# Test
# ----------------------------------------------------------------------------
if __name__ == "__main__":
    B = 2           # batch
    C = 8           # num_cols
    E = 32          # embedding_size

    key = jax.random.PRNGKey(0)
    k_x, k_w = jax.random.split(key)

    # Deterministic parameter init mirroring the module's __init__:
    #   con_w ~ U(-0.01, 0.01), con_b = zeros
    con_w = jax.random.uniform(k_w, (C, E), jnp.float32, minval=-0.01, maxval=0.01)
    con_b = jnp.zeros((C, E), jnp.float32)
    con_batch = jax.random.normal(k_x, (B, C), jnp.float32)

    out = jax.block_until_ready(con_mod_forward(con_batch, con_w, con_b))
    ref = jnp.maximum(con_batch[:, :, None] * con_w[None] + con_b[None], 0.0)
    assert out.shape == (B, C, E)
    assert jnp.allclose(out, ref, atol=1e-6, rtol=1e-6)

    # Larger batch with an explicit tile size -> exercises the multi-tile grid
    # (including a partial final block: 200 rows, tiles of 64).
    B2 = 200
    xb = jax.random.normal(jax.random.PRNGKey(1), (B2, C), jnp.float32)
    out2 = jax.block_until_ready(con_mod_forward(xb, con_w, con_b, block_b=64))
    ref2 = jnp.maximum(xb[:, :, None] * con_w[None] + con_b[None], 0.0)
    assert out2.shape == (B2, C, E)
    assert jnp.allclose(out2, ref2, atol=1e-6, rtol=1e-6)

    print("KERNEL_OK")
</pallas_src>

<mosaic_0001>
module attributes {stable_mosaic.version = 11 : i64} {
  func.func @kernel(%arg0: i32, %arg1: i32, %arg2: memref<2x8xf32, #tpu.memory_space<vmem>>, %arg3: memref<8x256xf32, #tpu.memory_space<vmem>>, %arg4: memref<1x256xf32, #tpu.memory_space<vmem>>, %arg5: memref<1x256xf32, #tpu.memory_space<vmem>>, %arg6: memref<2x256xf32, #tpu.memory_space<vmem>>) attributes {dimension_semantics = [#tpu.dimension_semantics<parallel>, #tpu.dimension_semantics<parallel>], iteration_bounds = array<i64: 1, 1>, scalar_prefetch = 0 : i64, scratch_operands = 0 : i64, tpu.core_type = #tpu.core_type<tc>, window_params = [{transform_indices = @transform_0, window_bounds = array<i64: 2, 8>}, {pipeline_mode = #tpu.pipeline_mode<synchronous>, transform_indices = @transform_1, window_bounds = array<i64: 8, 256>}, {transform_indices = @transform_2, window_bounds = array<i64: 1, 256>}, {transform_indices = @transform_3, window_bounds = array<i64: 1, 256>}, {transform_indices = @transform_4, window_bounds = array<i64: 2, 256>}]} {
    %c0 = arith.constant 0 : index
    %c0_0 = arith.constant 0 : index
    %0 = vector.load %arg4[%c0, %c0_0] : memref<1x256xf32, #tpu.memory_space<vmem>>, vector<1x256xf32>
    %c0_1 = arith.constant 0 : index
    %c0_2 = arith.constant 0 : index
    %1 = vector.load %arg5[%c0_1, %c0_2] : memref<1x256xf32, #tpu.memory_space<vmem>>, vector<1x256xf32>
    %c0_3 = arith.constant 0 : index
    %c0_4 = arith.constant 0 : index
    %2 = vector.load %arg3[%c0_3, %c0_4] : memref<8x256xf32, #tpu.memory_space<vmem>>, vector<8x256xf32>
    %c0_5 = arith.constant 0 : index
    %c0_6 = arith.constant 0 : index
    %3 = vector.load %arg2[%c0_5, %c0_6] : memref<2x8xf32, #tpu.memory_space<vmem>>, vector<2x8xf32>
    %cst = arith.constant dense<0.000000e+00> : vector<2x256xf32>
    %4 = tpu.matmul %3, %2, %cst {dimension_numbers = #tpu.dot_dimension_numbers<[1], [0], [0], [1], [0, 0, 1, 1], [], []>, precision = #tpu.contract_precision<fp32>} : vector<2x8xf32>, vector<8x256xf32>, vector<2x256xf32> -> vector<2x256xf32>
    %5 = vector.broadcast %0 : vector<1x256xf32> to vector<2x256xf32>
    %6 = arith.mulf %4, %5 : vector<2x256xf32>
    %7 = vector.broadcast %1 : vector<1x256xf32> to vector<2x256xf32>
    %8 = arith.addf %6, %7 : vector<2x256xf32>
    %cst_7 = arith.constant 0.000000e+00 : f32
    %9 = vector.broadcast %cst_7 : f32 to vector<2x256xf32>
    %10 = arith.maximumf %8, %9 : vector<2x256xf32>
    %c0_8 = arith.constant 0 : index
    %c0_9 = arith.constant 0 : index
    %11 = vector.load %arg6[%c0_8, %c0_9] : memref<2x256xf32, #tpu.memory_space<vmem>>, vector<2x256xf32>
    tpu.vector_store %arg6[%c0_8, %c0_9], %10 {strides = array<i32>} : memref<2x256xf32, #tpu.memory_space<vmem>>, vector<2x256xf32>,
    return
  }
  func.func @transform_0(%arg0: i32, %arg1: i32) -> (i32, i32) {
    %c0_i32 = arith.constant 0 : i32
    return %arg0, %arg1 : i32, i32
  }
  func.func @transform_1(%arg0: i32, %arg1: i32) -> (i32, i32) {
    %c0_i32 = arith.constant 0 : i32
    %c0_i32_0 = arith.constant 0 : i32
    %c0_i32_1 = arith.constant 0 : i32
    return %c0_i32, %c0_i32_0 : i32, i32
  }
  func.func @transform_2(%arg0: i32, %arg1: i32) -> (i32, i32) {
    %c0_i32 = arith.constant 0 : i32
    %c0_i32_0 = arith.constant 0 : i32
    return %c0_i32, %arg1 : i32, i32
  }
  func.func @transform_3(%arg0: i32, %arg1: i32) -> (i32, i32) {
    %c0_i32 = arith.constant 0 : i32
    %c0_i32_0 = arith.constant 0 : i32
    return %c0_i32, %arg1 : i32, i32
  }
  func.func @transform_4(%arg0: i32, %arg1: i32) -> (i32, i32) {
    %c0_i32 = arith.constant 0 : i32
    return %arg0, %arg1 : i32, i32
  }
}

</mosaic_0001>

<llo_original>
// kernel: tpu_custom_call.1
$region0: #{tpu_custom_call.1}
  #allocation0 [shape = 'u32[]', space=smem, size = 0x4, offset = 0x4, fixed_abs, tag = 'smem constant byte address 0x4 - core index']
  #allocation1 [shape = 'u32[144,128]{1,0:T(1,128)}', space=vmem, size = 0x12000, scoped, tag = 'internal scratch']
  %s0 = inlined_call_operand.hbm [shape: f32[2,8], index: 0, kind: input, shape index: {}]
  %s1 = inlined_call_operand.hbm [shape: f32[8,256], index: 1, kind: input, shape index: {}]
  %s2 = inlined_call_operand.vmem [shape: f32[1,256], index: 2, kind: input, shape index: {}]
  %s3 = inlined_call_operand.vmem [shape: f32[1,256], index: 3, kind: input, shape index: {}]
  %s4 = inlined_call_operand.hbm [shape: f32[2,256], index: 4, kind: output, shape index: {}]
  %s5 = sld [smem:[#allocation0]]
  $region34: #{tpu_custom_call.1} parent=0
    _
  %s7 = ssub.s32 1, %s5
  %s8 = scalar_select 0, %s7, %s5
  $region1: #{tpu_custom_call.1} parent=0
    #allocation2 [shape = 'u8[1024]{0}', space=vmem, size = 0x400, scoped, tag = 'input window, operand 0, single buffered']
    #allocation3 [shape = 's32[1]{0}', space=sflag, size = 0x4, scoped, tag = 'scoped memory for tpu_custom_call.1']
    #allocation4 [shape = 's32[1]{0}', space=sflag, size = 0x4, scoped, tag = 'scoped memory for tpu_custom_call.1']
    #allocation5 [shape = 'u8[8192]{0}', space=vmem, size = 0x2000, scoped, tag = 'input window, operand 1, single buffered']
    #allocation6 [shape = 's32[1]{0}', space=sflag, size = 0x4, scoped, tag = 'scoped memory for tpu_custom_call.1']
    #allocation7 [shape = 'u8[2048]{0}', space=vmem, size = 0x800, scoped, tag = 'output window, operand 0, single buffered']
    %9 = vsyncpa [#allocation3], 0
    %10 = vsyncpa [#allocation6], 0
    %11 = vsyncpa [#allocation4], 0
    // Predicated region
    $region2: #{tpu_custom_call.1} parent=1 // pred_check
      _
    $region3: #{tpu_custom_call.1} parent=1 // pred_check_branch
      %13 = sbr.rel (0) target = $region5
    $region4: #{tpu_custom_call.1} parent=1 // pred_region
      %s15 = ssub.s32 32, 32
      %16 = vsyncadd [#allocation3], %s15
      %s18 = sshll.u32 [#allocation2], 4
      %s19 = int_to_ptr.vmem [resolvable:$true] %s18
      %21 = dma.hbm_to_vmem [thread:$0]  %s0, 32, %s19, [#allocation3]
    $region5: #{tpu_custom_call.1} parent=1 // pred_fallthru
      _
    // Predicated region
    $region6: #{tpu_custom_call.1} parent=1 // pred_check
      _
    $region7: #{tpu_custom_call.1} parent=1 // pred_check_branch
      %23 = sbr.rel (0) target = $region9
    $region8: #{tpu_custom_call.1} parent=1 // pred_region
      %s25 = ssub.s32 256, 256
      %26 = vsyncadd [#allocation6], %s25
      %s28 = sshll.u32 [#allocation5], 4
      %s29 = int_to_ptr.vmem [resolvable:$true] %s28
      %31 = dma.hbm_to_vmem [thread:$0]  %s1, 256, %s29, [#allocation6]
    $region9: #{tpu_custom_call.1} parent=1 // pred_fallthru
      _
    // Predicated region
    $region10: #{tpu_custom_call.1} parent=1 // pred_check
      _
    $region11: #{tpu_custom_call.1} parent=1 // pred_check_branch
      %33 = sbr.rel (0) target = $region13
    $region12: #{tpu_custom_call.1} parent=1 // pred_region
      _
    $region13: #{tpu_custom_call.1} parent=1 // pred_fallthru
      _
    // Predicated region
    $region14: #{tpu_custom_call.1} parent=1 // pred_check
      _
    $region15: #{tpu_custom_call.1} parent=1 // pred_check_branch
      %35 = sbr.rel (0) target = $region17
    $region16: #{tpu_custom_call.1} parent=1 // pred_region
      _
    $region17: #{tpu_custom_call.1} parent=1 // pred_fallthru
      _
    // Predicated region
    $region18: #{tpu_custom_call.1} parent=1 // pred_check
      _
    $region19: #{tpu_custom_call.1} parent=1 // pred_check_branch
      %37 = sbr.rel (0) target = $region21
    $region20: #{tpu_custom_call.1} parent=1 // pred_region
      %38 = dma.done [#allocation3], 32
    $region21: #{tpu_custom_call.1} parent=1 // pred_fallthru
      _
    // Predicated region
    $region22: #{tpu_custom_call.1} parent=1 // pred_check
      _
    $region23: #{tpu_custom_call.1} parent=1 // pred_check_branch
      %40 = sbr.rel (0) target = $region25
    $region24: #{tpu_custom_call.1} parent=1 // pred_region
      %41 = dma.done [#allocation6], 256
    $region25: #{tpu_custom_call.1} parent=1 // pred_fallthru
      _
    %v42 = vld [vmem:[%s2] sm:$0x3]
    %v43 = vld [vmem:[%s3] sm:$0x3]
    %v44 = vld [vmem:[#allocation5] sm:$0xff]
    %v45 = vld [vmem:[#allocation5 + $0x8] sm:$0xff]
    %v46 = vld [vmem:[#allocation2] sm:$0x3]
    %vm47 = vcmask 64512
    %v49 = vsel %vm47, %v46, 0
    %v51 = vand.u32 %v45, 4294901760
    %52 = vmatprep.subr.mxu0 %v51
    %v53 = vand.u32 %v44, 4294901760
    %54 = vmatpush1.msra.mxu0 %v53
    %55 = vmatprep.subr.mxu0 0.0
    %56 = vmatpush1.msra.mxu0 0.0
    %57 = vmatprep.subr.mxu0 0.0
    %58 = vmatpush1.msra.mxu0 0.0
    %59 = vmatprep.subr.mxu0 0.0
    %60 = vmatpush1.msra.mxu0 0.0
    %61 = vmatprep.subr.mxu0 0.0
    %62 = vmatpush1.msra.mxu0 0.0
    %63 = vmatprep.subr.mxu0 0.0
    %64 = vmatpush1.msra.mxu0 0.0
    %65 = vmatprep.subr.mxu0 0.0
    %66 = vmatpush1.msra.mxu0 0.0
    %67 = vmatprep.subr.mxu0 0.0
    %68 = vmatpush1.msra.mxu0 0.0
    %69 = vmatprep.subr.mxu0 0.0
    %70 = vmatpush1.msra.mxu0 0.0
    %71 = vmatprep.subr.mxu0 0.0
    %72 = vmatpush1.msra.mxu0 0.0
    %73 = vmatprep.subr.mxu0 0.0
    %74 = vmatpush1.msra.mxu0 0.0
    %75 = vmatprep.subr.mxu0 0.0
    %76 = vmatpush1.msra.mxu0 0.0
    %77 = vmatprep.subr.mxu0 0.0
    %78 = vmatpush1.msra.mxu0 0.0
    %79 = vmatprep.subr.mxu0 0.0
    %80 = vmatpush1.msra.mxu0 0.0
    %81 = vmatprep.subr.mxu0 0.0
    %82 = vmatpush1.msra.mxu0 0.0
    %83 = vmatprep.subr.mxu0 0.0
    %84 = vmatpush1.msra.mxu0 0.0
    %85 = vmatprep.subr.mxu0 0.0
    %86 = vmatpush1.msra.mxu0 0.0
    %87 = vmatprep.subr.mxu0 0.0
    %88 = vmatpush1.msra.mxu0 0.0
    %89 = vmatprep.subr.mxu0 0.0
    %90 = vmatpush1.msra.mxu0 0.0
    %91 = vmatprep.subr.mxu0 0.0
    %92 = vmatpush1.msra.mxu0 0.0
    %93 = vmatprep.subr.mxu0 0.0
    %94 = vmatpush1.msra.mxu0 0.0
    %95 = vmatprep.subr.mxu0 0.0
    %96 = vmatpush1.msra.mxu0 0.0
    %97 = vmatprep.subr.mxu0 0.0
    %98 = vmatpush1.msra.mxu0 0.0
    %99 = vmatprep.subr.mxu0 0.0
    %100 = vmatpush1.msra.mxu0 0.0
    %101 = vmatprep.subr.mxu0 0.0
    %102 = vmatpush1.msra.mxu0 0.0
    %103 = vmatprep.subr.mxu0 0.0
    %104 = vmatpush1.msra.mxu0 0.0
    %105 = vmatprep.subr.mxu0 0.0
    %106 = vmatpush1.msra.mxu0 0.0
    %107 = vmatprep.subr.mxu0 0.0
    %108 = vmatpush1.msra.mxu0 0.0
    %109 = vmatprep.subr.mxu0 0.0
    %110 = vmatpush1.msra.mxu0 0.0
    %111 = vmatprep.subr.mxu0 0.0
    %112 = vmatpush1.msra.mxu0 0.0
    %113 = vmatprep.subr.mxu0 0.0
    %114 = vmatpush1.msra.mxu0 0.0
    %115 = vmatprep.subr.mxu0 0.0
    %116 = vmatpush1.msra.mxu0 0.0
    %117 = vmatprep.mubr.f32.mxu0 0.0
    %v118 = vand.u32 %v49, 4294901760
    %v119 = vsub.f32 %v49, %v118
    %v120 = vand.u32 %v119, 4294901760
    %v121 = vsub.f32 %v119, %v120
    %v122 = vand.u32 %v121, 4294901760
    %123 = vmatmul.mubr.f32.gmra.mrb[0].mxu0 %v122
    %v124 = vpop.f32.mrb[0].mxu0
    %v125 = vadd.f32 0.0, %v124
    %v126 = vpop.f32.mrb[0].mxu0
    %v127 = vadd.f32 0.0, %v126
    %128 = vdwg.mxu0
    %v129 = vand.u32 %v45, 4294901760
    %v130 = vsub.f32 %v45, %v129
    %v131 = vand.u32 %v130, 4294901760
    %v132 = vsub.f32 %v130, %v131
    %v133 = vand.u32 %v132, 4294901760
    %134 = vmatprep.subr.mxu0 %v133
    %v135 = vand.u32 %v44, 4294901760
    %v136 = vsub.f32 %v44, %v135
    %v137 = vand.u32 %v136, 4294901760
    %v138 = vsub.f32 %v136, %v137
    %v139 = vand.u32 %v138, 4294901760
    %140 = vmatpush1.msra.mxu0 %v139
    %141 = vmatprep.subr.mxu0 0.0
    %142 = vmatpush1.msra.mxu0 0.0
    %143 = vmatprep.subr.mxu0 0.0
    %144 = vmatpush1.msra.mxu0 0.0
    %145 = vmatprep.subr.mxu0 0.0
    %146 = vmatpush1.msra.mxu0 0.0
    %147 = vmatprep.subr.mxu0 0.0
    %148 = vmatpush1.msra.mxu0 0.0
    %149 = vmatprep.subr.mxu0 0.0
    %150 = vmatpush1.msra.mxu0 0.0
    %151 = vmatprep.subr.mxu0 0.0
    %152 = vmatpush1.msra.mxu0 0.0
    %153 = vmatprep.subr.mxu0 0.0
    %154 = vmatpush1.msra.mxu0 0.0
    %155 = vmatprep.subr.mxu0 0.0
    %156 = vmatpush1.msra.mxu0 0.0
    %157 = vmatprep.subr.mxu0 0.0
    %158 = vmatpush1.msra.mxu0 0.0
    %159 = vmatprep.subr.mxu0 0.0
    %160 = vmatpush1.msra.mxu0 0.0
    %161 = vmatprep.subr.mxu0 0.0
    %162 = vmatpush1.msra.mxu0 0.0
    %163 = vmatprep.subr.mxu0 0.0
    %164 = vmatpush1.msra.mxu0 0.0
    %165 = vmatprep.subr.mxu0 0.0
    %166 = vmatpush1.msra.mxu0 0.0
    %167 = vmatprep.subr.mxu0 0.0
    %168 = vmatpush1.msra.mxu0 0.0
    %169 = vmatprep.subr.mxu0 0.0
    %170 = vmatpush1.msra.mxu0 0.0
    %171 = vmatprep.subr.mxu0 0.0
    %172 = vmatpush1.msra.mxu0 0.0
    %173 = vmatprep.subr.mxu0 0.0
    %174 = vmatpush1.msra.mxu0 0.0
    %175 = vmatprep.subr.mxu0 0.0
    %176 = vmatpush1.msra.mxu0 0.0
    %177 = vmatprep.subr.mxu0 0.0
    %178 = vmatpush1.msra.mxu0 0.0
    %179 = vmatprep.subr.mxu0 0.0
    %180 = vmatpush1.msra.mxu0 0.0
    %181 = vmatprep.subr.mxu0 0.0
    %182 = vmatpush1.msra.mxu0 0.0
    %183 = vmatprep.subr.mxu0 0.0
    %184 = vmatpush1.msra.mxu0 0.0
    %185 = vmatprep.subr.mxu0 0.0
    %186 = vmatpush1.msra.mxu0 0.0
    %187 = vmatprep.subr.mxu0 0.0
    %188 = vmatpush1.msra.mxu0 0.0
    %189 = vmatprep.subr.mxu0 0.0
    %190 = vmatpush1.msra.mxu0 0.0
    %191 = vmatprep.subr.mxu0 0.0
    %192 = vmatpush1.msra.mxu0 0.0
    %193 = vmatprep.subr.mxu0 0.0
    %194 = vmatpush1.msra.mxu0 0.0
    %195 = vmatprep.subr.mxu0 0.0
    %196 = vmatpush1.msra.mxu0 0.0
    %197 = vmatprep.subr.mxu0 0.0
    %198 = vmatpush1.msra.mxu0 0.0
    %199 = vmatprep.subr.mxu0 0.0
    %200 = vmatpush1.msra.mxu0 0.0
    %201 = vmatprep.subr.mxu0 0.0
    %202 = vmatpush1.msra.mxu0 0.0
    %203 = vmatprep.mubr.f32.mxu0 0.0
    %v204 = vand.u32 %v49, 4294901760
    %205 = vmatmul.mubr.f32.gmra.mrb[0].mxu0 %v204
    %v206 = vpop.f32.mrb[0].mxu0
    %v207 = vadd.f32 %v125, %v206
    %v208 = vpop.f32.mrb[0].mxu0
    %v209 = vadd.f32 %v127, %v208
    %210 = vdwg.mxu0
    %v211 = vand.u32 %v45, 4294901760
    %v212 = vsub.f32 %v45, %v211
    %213 = vmatprep.subr.mxu0 %v212
    %v214 = vand.u32 %v44, 4294901760
    %v215 = vsub.f32 %v44, %v214
    %216 = vmatpush1.msra.mxu0 %v215
    %217 = vmatprep.subr.mxu0 0.0
    %218 = vmatpush1.msra.mxu0 0.0
    %219 = vmatprep.subr.mxu0 0.0
    %220 = vmatpush1.msra.mxu0 0.0
    %221 = vmatprep.subr.mxu0 0.0
    %222 = vmatpush1.msra.mxu0 0.0
    %223 = vmatprep.subr.mxu0 0.0
    %224 = vmatpush1.msra.mxu0 0.0
    %225 = vmatprep.subr.mxu0 0.0
    %226 = vmatpush1.msra.mxu0 0.0
    %227 = vmatprep.subr.mxu0 0.0
    %228 = vmatpush1.msra.mxu0 0.0
    %229 = vmatprep.subr.mxu0 0.0
    %230 = vmatpush1.msra.mxu0 0.0
    %231 = vmatprep.subr.mxu0 0.0
    %232 = vmatpush1.msra.mxu0 0.0
    %233 = vmatprep.subr.mxu0 0.0
    %234 = vmatpush1.msra.mxu0 0.0
    %235 = vmatprep.subr.mxu0 0.0
    %236 = vmatpush1.msra.mxu0 0.0
    %237 = vmatprep.subr.mxu0 0.0
    %238 = vmatpush1.msra.mxu0 0.0
    %239 = vmatprep.subr.mxu0 0.0
    %240 = vmatpush1.msra.mxu0 0.0
    %241 = vmatprep.subr.mxu0 0.0
    %242 = vmatpush1.msra.mxu0 0.0
    %243 = vmatprep.subr.mxu0 0.0
    %244 = vmatpush1.msra.mxu0 0.0
    %245 = vmatprep.subr.mxu0 0.0
    %246 = vmatpush1.msra.mxu0 0.0
    %247 = vmatprep.subr.mxu0 0.0
    %248 = vmatpush1.msra.mxu0 0.0
    %249 = vmatprep.subr.mxu0 0.0
    %250 = vmatpush1.msra.mxu0 0.0
    %251 = vmatprep.subr.mxu0 0.0
    %252 = vmatpush1.msra.mxu0 0.0
    %253 = vmatprep.subr.mxu0 0.0
    %254 = vmatpush1.msra.mxu0 0.0
    %255 = vmatprep.subr.mxu0 0.0
    %256 = vmatpush1.msra.mxu0 0.0
    %257 = vmatprep.subr.mxu0 0.0
    %258 = vmatpush1.msra.mxu0 0.0
    %259 = vmatprep.subr.mxu0 0.0
    %260 = vmatpush1.msra.mxu0 0.0
    %261 = vmatprep.subr.mxu0 0.0
    %262 = vmatpush1.msra.mxu0 0.0
    %263 = vmatprep.subr.mxu0 0.0
    %264 = vmatpush1.msra.mxu0 0.0
    %265 = vmatprep.subr.mxu0 0.0
    %266 = vmatpush1.msra.mxu0 0.0
    %267 = vmatprep.subr.mxu0 0.0
    %268 = vmatpush1.msra.mxu0 0.0
    %269 = vmatprep.subr.mxu0 0.0
    %270 = vmatpush1.msra.mxu0 0.0
    %271 = vmatprep.subr.mxu0 0.0
    %272 = vmatpush1.msra.mxu0 0.0
    %273 = vmatprep.subr.mxu0 0.0
    %274 = vmatpush1.msra.mxu0 0.0
    %275 = vmatprep.subr.mxu0 0.0
    %276 = vmatpush1.msra.mxu0 0.0
    %277 = vmatprep.subr.mxu0 0.0
    %278 = vmatpush1.msra.mxu0 0.0
    %279 = vmatprep.mubr.f32.mxu0 0.0
    %v280 = vand.u32 %v49, 4294901760
    %v281 = vsub.f32 %v49, %v280
    %282 = vmatmul.mubr.f32.gmra.mrb[0].mxu0 %v281
    %v283 = vpop.f32.mrb[0].mxu0
    %v284 = vadd.f32 %v207, %v283
    %v285 = vpop.f32.mrb[0].mxu0
    %v286 = vadd.f32 %v209, %v285
    %287 = vdwg.mxu0
    %v288 = vand.u32 %v45, 4294901760
    %289 = vmatprep.subr.mxu0 %v288
    %v290 = vand.u32 %v44, 4294901760
    %291 = vmatpush1.msra.mxu0 %v290
    %292 = vmatprep.subr.mxu0 0.0
    %293 = vmatpush1.msra.mxu0 0.0
    %294 = vmatprep.subr.mxu0 0.0
    %295 = vmatpush1.msra.mxu0 0.0
    %296 = vmatprep.subr.mxu0 0.0
    %297 = vmatpush1.msra.mxu0 0.0
    %298 = vmatprep.subr.mxu0 0.0
    %299 = vmatpush1.msra.mxu0 0.0
    %300 = vmatprep.subr.mxu0 0.0
    %301 = vmatpush1.msra.mxu0 0.0
    %302 = vmatprep.subr.mxu0 0.0
    %303 = vmatpush1.msra.mxu0 0.0
    %304 = vmatprep.subr.mxu0 0.0
    %305 = vmatpush1.msra.mxu0 0.0
    %306 = vmatprep.subr.mxu0 0.0
    %307 = vmatpush1.msra.mxu0 0.0
    %308 = vmatprep.subr.mxu0 0.0
    %309 = vmatpush1.msra.mxu0 0.0
    %310 = vmatprep.subr.mxu0 0.0
    %311 = vmatpush1.msra.mxu0 0.0
    %312 = vmatprep.subr.mxu0 0.0
    %313 = vmatpush1.msra.mxu0 0.0
    %314 = vmatprep.subr.mxu0 0.0
    %315 = vmatpush1.msra.mxu0 0.0
    %316 = vmatprep.subr.mxu0 0.0
    %317 = vmatpush1.msra.mxu0 0.0
    %318 = vmatprep.subr.mxu0 0.0
    %319 = vmatpush1.msra.mxu0 0.0
    %320 = vmatprep.subr.mxu0 0.0
    %321 = vmatpush1.msra.mxu0 0.0
    %322 = vmatprep.subr.mxu0 0.0
    %323 = vmatpush1.msra.mxu0 0.0
    %324 = vmatprep.subr.mxu0 0.0
    %325 = vmatpush1.msra.mxu0 0.0
    %326 = vmatprep.subr.mxu0 0.0
    %327 = vmatpush1.msra.mxu0 0.0
    %328 = vmatprep.subr.mxu0 0.0
    %329 = vmatpush1.msra.mxu0 0.0
    %330 = vmatprep.subr.mxu0 0.0
    %331 = vmatpush1.msra.mxu0 0.0
    %332 = vmatprep.subr.mxu0 0.0
    %333 = vmatpush1.msra.mxu0 0.0
    %334 = vmatprep.subr.mxu0 0.0
    %335 = vmatpush1.msra.mxu0 0.0
    %336 = vmatprep.subr.mxu0 0.0
    %337 = vmatpush1.msra.mxu0 0.0
    %338 = vmatprep.subr.mxu0 0.0
    %339 = vmatpush1.msra.mxu0 0.0
    %340 = vmatprep.subr.mxu0 0.0
    %341 = vmatpush1.msra.mxu0 0.0
    %342 = vmatprep.subr.mxu0 0.0
    %343 = vmatpush1.msra.mxu0 0.0
    %344 = vmatprep.subr.mxu0 0.0
    %345 = vmatpush1.msra.mxu0 0.0
    %346 = vmatprep.subr.mxu0 0.0
    %347 = vmatpush1.msra.mxu0 0.0
    %348 = vmatprep.subr.mxu0 0.0
    %349 = vmatpush1.msra.mxu0 0.0
    %350 = vmatprep.subr.mxu0 0.0
    %351 = vmatpush1.msra.mxu0 0.0
    %352 = vmatprep.subr.mxu0 0.0
    %353 = vmatpush1.msra.mxu0 0.0
    %354 = vmatprep.mubr.f32.mxu0 0.0
    %v355 = vand.u32 %v49, 4294901760
    %v356 = vsub.f32 %v49, %v355
    %v357 = vand.u32 %v356, 4294901760
    %358 = vmatmul.mubr.f32.gmra.mrb[0].mxu0 %v357
    %v359 = vpop.f32.mrb[0].mxu0
    %v360 = vadd.f32 %v284, %v359
    %v361 = vpop.f32.mrb[0].mxu0
    %v362 = vadd.f32 %v286, %v361
    %363 = vdwg.mxu0
    %v364 = vand.u32 %v45, 4294901760
    %v365 = vsub.f32 %v45, %v364
    %v366 = vand.u32 %v365, 4294901760
    %367 = vmatprep.subr.mxu0 %v366
    %v368 = vand.u32 %v44, 4294901760
    %v369 = vsub.f32 %v44, %v368
    %v370 = vand.u32 %v369, 4294901760
    %371 = vmatpush1.msra.mxu0 %v370
    %372 = vmatprep.subr.mxu0 0.0
    %373 = vmatpush1.msra.mxu0 0.0
    %374 = vmatprep.subr.mxu0 0.0
    %375 = vmatpush1.msra.mxu0 0.0
    %376 = vmatprep.subr.mxu0 0.0
    %377 = vmatpush1.msra.mxu0 0.0
    %378 = vmatprep.subr.mxu0 0.0
    %379 = vmatpush1.msra.mxu0 0.0
    %380 = vmatprep.subr.mxu0 0.0
    %381 = vmatpush1.msra.mxu0 0.0
    %382 = vmatprep.subr.mxu0 0.0
    %383 = vmatpush1.msra.mxu0 0.0
    %384 = vmatprep.subr.mxu0 0.0
    %385 = vmatpush1.msra.mxu0 0.0
    %386 = vmatprep.subr.mxu0 0.0
    %387 = vmatpush1.msra.mxu0 0.0
    %388 = vmatprep.subr.mxu0 0.0
    %389 = vmatpush1.msra.mxu0 0.0
    %390 = vmatprep.subr.mxu0 0.0
    %391 = vmatpush1.msra.mxu0 0.0
    %392 = vmatprep.subr.mxu0 0.0
    %393 = vmatpush1.msra.mxu0 0.0
    %394 = vmatprep.subr.mxu0 0.0
    %395 = vmatpush1.msra.mxu0 0.0
    %396 = vmatprep.subr.mxu0 0.0
    %397 = vmatpush1.msra.mxu0 0.0
    %398 = vmatprep.subr.mxu0 0.0
    %399 = vmatpush1.msra.mxu0 0.0
    %400 = vmatprep.subr.mxu0 0.0
    %401 = vmatpush1.msra.mxu0 0.0
    %402 = vmatprep.subr.mxu0 0.0
    %403 = vmatpush1.msra.mxu0 0.0
    %404 = vmatprep.subr.mxu0 0.0
    %405 = vmatpush1.msra.mxu0 0.0
    %406 = vmatprep.subr.mxu0 0.0
    %407 = vmatpush1.msra.mxu0 0.0
    %408 = vmatprep.subr.mxu0 0.0
    %409 = vmatpush1.msra.mxu0 0.0
    %410 = vmatprep.subr.mxu0 0.0
    %411 = vmatpush1.msra.mxu0 0.0
    %412 = vmatprep.subr.mxu0 0.0
    %413 = vmatpush1.msra.mxu0 0.0
    %414 = vmatprep.subr.mxu0 0.0
    %415 = vmatpush1.msra.mxu0 0.0
    %416 = vmatprep.subr.mxu0 0.0
    %417 = vmatpush1.msra.mxu0 0.0
    %418 = vmatprep.subr.mxu0 0.0
    %419 = vmatpush1.msra.mxu0 0.0
    %420 = vmatprep.subr.mxu0 0.0
    %421 = vmatpush1.msra.mxu0 0.0
    %422 = vmatprep.subr.mxu0 0.0
    %423 = vmatpush1.msra.mxu0 0.0
    %424 = vmatprep.subr.mxu0 0.0
    %425 = vmatpush1.msra.mxu0 0.0
    %426 = vmatprep.subr.mxu0 0.0
    %427 = vmatpush1.msra.mxu0 0.0
    %428 = vmatprep.subr.mxu0 0.0
    %429 = vmatpush1.msra.mxu0 0.0
    %430 = vmatprep.subr.mxu0 0.0
    %431 = vmatpush1.msra.mxu0 0.0
    %432 = vmatprep.subr.mxu0 0.0
    %433 = vmatpush1.msra.mxu0 0.0
    %434 = vmatprep.mubr.f32.mxu0 0.0
    %v435 = vand.u32 %v49, 4294901760
    %436 = vmatmul.mubr.f32.gmra.mrb[0].mxu0 %v435
    %v437 = vpop.f32.mrb[0].mxu0
    %v438 = vadd.f32 %v360, %v437
    %v439 = vpop.f32.mrb[0].mxu0
    %v440 = vadd.f32 %v362, %v439
    %441 = vdwg.mxu0
    %v442 = vand.u32 %v45, 4294901760
    %443 = vmatprep.subr.mxu0 %v442
    %v444 = vand.u32 %v44, 4294901760
    %445 = vmatpush1.msra.mxu0 %v444
    %446 = vmatprep.subr.mxu0 0.0
    %447 = vmatpush1.msra.mxu0 0.0
    %448 = vmatprep.subr.mxu0 0.0
    %449 = vmatpush1.msra.mxu0 0.0
    %450 = vmatprep.subr.mxu0 0.0
    %451 = vmatpush1.msra.mxu0 0.0
    %452 = vmatprep.subr.mxu0 0.0
    %453 = vmatpush1.msra.mxu0 0.0
    %454 = vmatprep.subr.mxu0 0.0
    %455 = vmatpush1.msra.mxu0 0.0
    %456 = vmatprep.subr.mxu0 0.0
    %457 = vmatpush1.msra.mxu0 0.0
    %458 = vmatprep.subr.mxu0 0.0
    %459 = vmatpush1.msra.mxu0 0.0
    %460 = vmatprep.subr.mxu0 0.0
    %461 = vmatpush1.msra.mxu0 0.0
    %462 = vmatprep.subr.mxu0 0.0
    %463 = vmatpush1.msra.mxu0 0.0
    %464 = vmatprep.subr.mxu0 0.0
    %465 = vmatpush1.msra.mxu0 0.0
    %466 = vmatprep.subr.mxu0 0.0
    %467 = vmatpush1.msra.mxu0 0.0
    %468 = vmatprep.subr.mxu0 0.0
    %469 = vmatpush1.msra.mxu0 0.0
    %470 = vmatprep.subr.mxu0 0.0
    %471 = vmatpush1.msra.mxu0 0.0
    %472 = vmatprep.subr.mxu0 0.0
    %473 = vmatpush1.msra.mxu0 0.0
    %474 = vmatprep.subr.mxu0 0.0
    %475 = vmatpush1.msra.mxu0 0.0
    %476 = vmatprep.subr.mxu0 0.0
    %477 = vmatpush1.msra.mxu0 0.0
    %478 = vmatprep.subr.mxu0 0.0
    %479 = vmatpush1.msra.mxu0 0.0
    %480 = vmatprep.subr.mxu0 0.0
    %481 = vmatpush1.msra.mxu0 0.0
    %482 = vmatprep.subr.mxu0 0.0
    %483 = vmatpush1.msra.mxu0 0.0
    %484 = vmatprep.subr.mxu0 0.0
    %485 = vmatpush1.msra.mxu0 0.0
    %486 = vmatprep.subr.mxu0 0.0
    %487 = vmatpush1.msra.mxu0 0.0
    %488 = vmatprep.subr.mxu0 0.0
    %489 = vmatpush1.msra.mxu0 0.0
    %490 = vmatprep.subr.mxu0 0.0
    %491 = vmatpush1.msra.mxu0 0.0
    %492 = vmatprep.subr.mxu0 0.0
    %493 = vmatpush1.msra.mxu0 0.0
    %494 = vmatprep.subr.mxu0 0.0
    %495 = vmatpush1.msra.mxu0 0.0
    %496 = vmatprep.subr.mxu0 0.0
    %497 = vmatpush1.msra.mxu0 0.0
    %498 = vmatprep.subr.mxu0 0.0
    %499 = vmatpush1.msra.mxu0 0.0
    %500 = vmatprep.subr.mxu0 0.0
    %501 = vmatpush1.msra.mxu0 0.0
    %502 = vmatprep.subr.mxu0 0.0
    %503 = vmatpush1.msra.mxu0 0.0
    %504 = vmatprep.subr.mxu0 0.0
    %505 = vmatpush1.msra.mxu0 0.0
    %506 = vmatprep.subr.mxu0 0.0
    %507 = vmatpush1.msra.mxu0 0.0
    %508 = vmatprep.mubr.f32.mxu0 0.0
    %v509 = vand.u32 %v49, 4294901760
    %510 = vmatmul.mubr.f32.gmra.mrb[0].mxu0 %v509
    %v511 = vpop.f32.mrb[0].mxu0
    %v512 = vadd.f32 %v438, %v511
    %v513 = vpop.f32.mrb[0].mxu0
    %v514 = vadd.f32 %v440, %v513
    %515 = vdwg.mxu0
    %v517 = vlaneseq
    %v518 = vshrl.u32 %v517, 7
    %v519 = vsub.s32 0, %v518
    %v520 = vrot.slane %v42, %v519
    %v521 = vlaneseq
    %v522 = vshrl.u32 %v521, 7
    %v523 = vsub.s32 1, %v522
    %v524 = vrot.slane %v42, %v523
    %v527 = vmul.f32 %v512, %v520
    %v528 = vmul.f32 %v514, %v524
    %v530 = vlaneseq
    %v531 = vshrl.u32 %v530, 7
    %v532 = vsub.s32 0, %v531
    %v533 = vrot.slane %v43, %v532
    %v534 = vlaneseq
    %v535 = vshrl.u32 %v534, 7
    %v536 = vsub.s32 1, %v535
    %v537 = vrot.slane %v43, %v536
    %v540 = vadd.f32 %v527, %v533
    %v541 = vadd.f32 %v528, %v537
    %v542 = vmax.f32 %v540, 0.0
    %v543 = vmax.f32 %v541, 0.0
    %v546 = vcombine.low %v542, %v543
    %v548 = vunpack.c.l.s4 1983009808
    %v549 = vunpack.c.0.s8 %v548
    %v550 = vlaneseq
    %v551 = vshrl.u32 %v550, 7
    %v552 = vsub.s32 %v549, %v551
    %v553 = vrot.slane %v546, %v552
    %555 = vst [vmem:[#allocation7] sm:$0xf] %v553
    // Predicated region
    $region26: #{tpu_custom_call.1} parent=1 // pred_check
      _
    $region27: #{tpu_custom_call.1} parent=1 // pred_check_branch
      %557 = sbr.rel (0) target = $region29
    $region28: #{tpu_custom_call.1} parent=1 // pred_region
      %s559 = ssub.s32 64, 64
      %560 = vsyncadd [#allocation4], %s559
      %s562 = sshll.u32 [#allocation7], 4
      %s563 = int_to_ptr.vmem [resolvable:$true] %s562
      %565 = dma.vmem_to_hbm [thread:$0]  %s563, 64, %s4, [#allocation4]
    $region29: #{tpu_custom_call.1} parent=1 // pred_fallthru
      _
    // Predicated region
    $region30: #{tpu_custom_call.1} parent=1 // pred_check
      _
    $region31: #{tpu_custom_call.1} parent=1 // pred_check_branch
      %567 = sbr.rel (0) target = $region33
    $region32: #{tpu_custom_call.1} parent=1 // pred_region
      %568 = dma.done [#allocation4], 64
    $region33: #{tpu_custom_call.1} parent=1 // pred_fallthru
      _
    %569 = vsyncpa [#allocation3], 1
    %570 = vsyncpa [#allocation6], 1
    %571 = vsyncpa [#allocation4], 1

</llo_original>
